<compile_context>
chip_gen: v6e
topology: v6e:2x2x1
jax: 0.10.0
libtpu: 0.0.40
codegen_flags: <defaults>
</compile_context>

<pallas_src>
import functools

import jax
import jax.numpy as jnp
from jax.experimental import pallas as pl
from jax.experimental.pallas import tpu as pltpu


def _round_up(v, m):
    return (v + m - 1) // m * m


def _ngram_fused_kernel(x_ref, w_ref, b_ref, o_ref, *, grams, l_cmp, l_outs,
                        out_offs, c_in, h_pad, bt, apply_relu):
    # x_ref: (Bt, L_in, C) bf16        w_ref: (sum_n n*C, H_pad) bf16
    # b_ref: (G, H_pad)   f32          o_ref: (Bt, L_total, H_pad) f32
    x = x_ref[...]
    m = bt * l_cmp
    w_row = 0
    for idx, n in enumerate(grams):          # static unroll over n-grams
        acc = jnp.zeros((m, h_pad), jnp.float32)
        for k in range(n):                   # static unroll over kernel taps
            xs = x[:, k:k + l_cmp, :].reshape(m, c_in)          # bf16
            wk = w_ref[pl.ds(w_row + k * c_in, c_in), :]        # (C, H_pad) bf16
            acc += jnp.dot(xs, wk, preferred_element_type=jnp.float32)
        w_row += n * c_in
        acc += b_ref[pl.ds(idx, 1), :]       # f32 bias, broadcast over rows
        if apply_relu:
            acc = jnp.maximum(acc, 0.0)
        y = acc.reshape(bt, l_cmp, h_pad)
        l_out = l_outs[idx]
        # write this n-gram's slab at its static offset in the fused output
        o_ref[:, pl.ds(out_offs[idx], l_out), :] = (
            y[:, :l_out, :].astype(o_ref.dtype))


def ngram_conv1d_fused(x, weights, biases, *, apply_relu=True,
                       target_m_rows=512):
    """Fused forward: for each (w_n, b_n) with w_n:(n, C, H), computes the
    Conv1d(kernel_size=n) of x:(B, L, C) (channels-last), optional ReLU, and
    returns the results concatenated along the sequence axis:
    (B, sum_n (L - n + 1), H)."""
    B, L, C = x.shape
    grams = tuple(int(w.shape[0]) for w in weights)
    H = int(weights[0].shape[-1])
    max_gram = max(grams)
    if L < max_gram:
        raise ValueError("sequence length must be >= max kernel size")
    G = len(grams)
    H_pad = _round_up(H, 128)

    l_outs = tuple(L - n + 1 for n in grams)
    out_offs, off = [], 0
    for lo in l_outs:
        out_offs.append(off)
        off += lo
    L_total = off

    # Shared compute length (16-aligned for clean bf16 sublane merges); only the
    # first l_out rows of each n-gram's result are stored.
    l_cmp = _round_up(L, 16)
    L_in = _round_up(l_cmp + max_gram - 1, 8)   # zero-padded input length

    # Batch tile (divisor of B) so the MXU M dimension ~= target_m_rows.
    bt_cap = max(1, min(B, -(-target_m_rows // l_cmp)))
    Bt = 1
    for d in range(bt_cap, 0, -1):
        if B % d == 0:
            Bt = d
            break

    # Inputs: zero-padded bf16 x, concatenated bf16 weights (row k*C + c holds
    # tap k / in-channel c), zero-padded f32 bias.
    x_p = jnp.pad(x, ((0, 0), (0, L_in - L), (0, 0))).astype(jnp.bfloat16)
    w_all = jnp.concatenate(
        [w.reshape(n * C, H) for n, w in zip(grams, weights)], axis=0)
    w_all = jnp.pad(w_all, ((0, 0), (0, H_pad - H))).astype(jnp.bfloat16)
    b_all = jnp.stack(
        [jnp.pad(b.astype(jnp.float32), (0, H_pad - H)) for b in biases],
        axis=0)

    kernel = functools.partial(
        _ngram_fused_kernel, grams=grams, l_cmp=l_cmp, l_outs=l_outs,
        out_offs=tuple(out_offs), c_in=C, h_pad=H_pad, bt=Bt,
        apply_relu=apply_relu)

    # Explicit VMEM budget: double-buffered x/out blocks + resident weights +
    # accumulator headroom; capped at 48 MiB (safe on v7x's 64 MiB per TC).
    xb = Bt * L_in * C * 2
    ob = Bt * L_total * H_pad * 4
    wb = w_all.shape[0] * H_pad * 2
    bb = G * H_pad * 4
    accb = 2 * Bt * l_cmp * H_pad * 4
    vmem_limit = int(min(48 * 1024 * 1024,
                         max(32 * 1024 * 1024, 2 * (xb + ob) + wb + bb + accb)))

    out = pl.pallas_call(
        kernel,
        out_shape=jax.ShapeDtypeStruct((B, L_total, H_pad), jnp.float32),
        grid_spec=pltpu.PrefetchScalarGridSpec(
            num_scalar_prefetch=0,
            grid=(B // Bt,),
            in_specs=[
                pl.BlockSpec((Bt, L_in, C), lambda i: (i, 0, 0)),
                pl.BlockSpec((w_all.shape[0], H_pad), lambda i: (0, 0)),
                pl.BlockSpec((G, H_pad), lambda i: (0, 0)),
            ],
            out_specs=pl.BlockSpec((Bt, L_total, H_pad), lambda i: (i, 0, 0)),
        ),
        compiler_params=pltpu.CompilerParams(
            dimension_semantics=("parallel",),
            vmem_limit_bytes=vmem_limit,
        ),
    )(x_p, w_all, b_all)

    return out if H_pad == H else out[:, :, :H]


def conv1d_forward(x, w, b):
    """Forward of the PyTorch Conv1d module: (B, L, C_in) -> (B, L-n+1, H)."""
    return ngram_conv1d_fused(x, [w], [b], apply_relu=False)


def ngramers_forward(x, weights, biases):
    """NGramers forward: per-n Conv1d -> ReLU -> Dropout(eval: identity), concat."""
    # TODO(synk): training-mode dropout is not implemented (eval-mode identity).
    return ngram_conv1d_fused(x, weights, biases, apply_relu=True)


def init_params(key, input_size, hidden_size, max_gram):
    """Deterministic Conv1d-style init. Weight stored channels-last as
    (n, C_in, H) == PyTorch's (H, C_in, n) transposed (2, 1, 0)."""
    weights, biases = [], []
    for n in range(1, max_gram + 1):
        key, kw, kb = jax.random.split(key, 3)
        fan_in = input_size * n
        bound = 1.0 / (fan_in ** 0.5)
        w = jax.random.uniform(
            kw, (n, input_size, hidden_size), jnp.float32, -bound, bound)
        b = jax.random.uniform(kb, (hidden_size,), jnp.float32, -bound, bound)
        weights.append(w)
        biases.append(b)
    return weights, biases


def _conv_ref(x, w, b, relu):
    """Pure-JAX f32 reference for one conv (unfold + einsum)."""
    L = x.shape[1]
    n = w.shape[0]
    l_out = L - n + 1
    y = jnp.zeros((x.shape[0], l_out, w.shape[-1]), jnp.float32)
    for k in range(n):
        y = y + jnp.einsum("blc,ch->blh", x[:, k:k + l_out, :], w[k])
    y = y + b[None, None, :]
    return jax.nn.relu(y) if relu else y


def conv1d_reference(x, w, b):
    return _conv_ref(x, w, b, relu=False)


def ngramers_reference(x, weights, biases):
    return jnp.concatenate(
        [_conv_ref(x, w, b, relu=True) for w, b in zip(weights, biases)],
        axis=1)


if __name__ == "__main__":
    # Small shapes consistent with the module's forward: x is (B, L, input_size)
    B, L, INPUT_SIZE, HIDDEN_SIZE, MAX_GRAM = 2, 16, 32, 32, 3
    DROPOUT_RATE = 0.1  # inference mode => identity; kept for signature parity

    key = jax.random.PRNGKey(0)
    key, kx = jax.random.split(key)
    x = jax.random.normal(kx, (B, L, INPUT_SIZE), jnp.float32)
    weights, biases = init_params(key, INPUT_SIZE, HIDDEN_SIZE, MAX_GRAM)

    # Plain Conv1d module forward (kernel_size=2, no activation).
    y_conv = jax.block_until_ready(conv1d_forward(x, weights[1], biases[1]))
    assert y_conv.shape == (B, L - 2 + 1, HIDDEN_SIZE), y_conv.shape
    # bf16 matmul inputs with f32 accumulation -> loosened tolerance vs f32 ref.
    assert jnp.allclose(y_conv, conv1d_reference(x, weights[1], biases[1]),
                        atol=3e-2, rtol=3e-2), "Conv1d mismatch vs reference"

    # Fused NGramers forward (n = 1..MAX_GRAM in a single pallas_call).
    out = jax.block_until_ready(ngramers_forward(x, weights, biases))
    expected_len = sum(L - n + 1 for n in range(1, MAX_GRAM + 1))
    assert out.shape == (B, expected_len, HIDDEN_SIZE), out.shape
    assert jnp.allclose(out, ngramers_reference(x, weights, biases),
                        atol=3e-2, rtol=3e-2), "NGramers mismatch vs reference"

    print("KERNEL_OK")
</pallas_src>

<mosaic_0001>
module attributes {stable_mosaic.version = 11 : i64} {
  func.func @_ngram_fused_kernel(%arg0: i32, %arg1: memref<2x24x32xbf16, #tpu.memory_space<vmem>>, %arg2: memref<64x128xbf16, #tpu.memory_space<vmem>>, %arg3: memref<1x128xf32, #tpu.memory_space<vmem>>, %arg4: memref<2x15x128xf32, #tpu.memory_space<vmem>>) attributes {dimension_semantics = [#tpu.dimension_semantics<parallel>], iteration_bounds = array<i64: 1>, scalar_prefetch = 0 : i64, scratch_operands = 0 : i64, tpu.core_type = #tpu.core_type<tc>, window_params = [{transform_indices = @transform_0, window_bounds = array<i64: 2, 24, 32>}, {pipeline_mode = #tpu.pipeline_mode<synchronous>, transform_indices = @transform_1, window_bounds = array<i64: 64, 128>}, {pipeline_mode = #tpu.pipeline_mode<synchronous>, transform_indices = @transform_2, window_bounds = array<i64: 1, 128>}, {transform_indices = @transform_3, window_bounds = array<i64: 2, 15, 128>}]} {
    %c0 = arith.constant 0 : index
    %c0_0 = arith.constant 0 : index
    %c0_1 = arith.constant 0 : index
    %0 = vector.load %arg1[%c0, %c0_0, %c0_1] : memref<2x24x32xbf16, #tpu.memory_space<vmem>>, vector<2x24x32xbf16>
    %cst = arith.constant 0.000000e+00 : f32
    %1 = vector.broadcast %cst : f32 to vector<32x128xf32>
    %2 = vector.extract_strided_slice %0 {offsets = [0, 0, 0], sizes = [2, 16, 32], strides = [1, 1, 1]} : vector<2x24x32xbf16> to vector<2x16x32xbf16>
    %3 = vector.shape_cast %2 : vector<2x16x32xbf16> to vector<32x32xbf16>
    %c0_2 = arith.constant 0 : index
    %c0_3 = arith.constant 0 : index
    %4 = vector.load %arg2[%c0_2, %c0_3] : memref<64x128xbf16, #tpu.memory_space<vmem>>, vector<32x128xbf16>
    %cst_4 = arith.constant dense<0.000000e+00> : vector<32x128xf32>
    %5 = tpu.matmul %3, %4, %cst_4 {dimension_numbers = #tpu.dot_dimension_numbers<[1], [0], [0], [1], [0, 0, 1, 1], [], []>} : vector<32x32xbf16>, vector<32x128xbf16>, vector<32x128xf32> -> vector<32x128xf32>
    %6 = arith.addf %1, %5 : vector<32x128xf32>
    %7 = vector.extract_strided_slice %0 {offsets = [0, 1, 0], sizes = [2, 16, 32], strides = [1, 1, 1]} : vector<2x24x32xbf16> to vector<2x16x32xbf16>
    %8 = vector.shape_cast %7 : vector<2x16x32xbf16> to vector<32x32xbf16>
    %c32 = arith.constant 32 : index
    %c0_5 = arith.constant 0 : index
    %9 = vector.load %arg2[%c32, %c0_5] : memref<64x128xbf16, #tpu.memory_space<vmem>>, vector<32x128xbf16>
    %cst_6 = arith.constant dense<0.000000e+00> : vector<32x128xf32>
    %10 = tpu.matmul %8, %9, %cst_6 {dimension_numbers = #tpu.dot_dimension_numbers<[1], [0], [0], [1], [0, 0, 1, 1], [], []>} : vector<32x32xbf16>, vector<32x128xbf16>, vector<32x128xf32> -> vector<32x128xf32>
    %11 = arith.addf %6, %10 : vector<32x128xf32>
    %c0_7 = arith.constant 0 : index
    %c0_8 = arith.constant 0 : index
    %12 = vector.load %arg3[%c0_7, %c0_8] : memref<1x128xf32, #tpu.memory_space<vmem>>, vector<1x128xf32>
    %13 = vector.broadcast %12 : vector<1x128xf32> to vector<32x128xf32>
    %14 = arith.addf %11, %13 : vector<32x128xf32>
    %15 = vector.shape_cast %14 : vector<32x128xf32> to vector<2x16x128xf32>
    %16 = vector.extract_strided_slice %15 {offsets = [0, 0, 0], sizes = [2, 15, 128], strides = [1, 1, 1]} : vector<2x16x128xf32> to vector<2x15x128xf32>
    %c0_9 = arith.constant 0 : index
    %c0_10 = arith.constant 0 : index
    %c0_11 = arith.constant 0 : index
    %17 = vector.load %arg4[%c0_9, %c0_10, %c0_11] : memref<2x15x128xf32, #tpu.memory_space<vmem>>, vector<2x15x128xf32>
    tpu.vector_store %arg4[%c0_9, %c0_10, %c0_11], %16 {strides = array<i32>} : memref<2x15x128xf32, #tpu.memory_space<vmem>>, vector<2x15x128xf32>,
    return
  }
  func.func @transform_0(%arg0: i32) -> (i32, i32, i32) {
    %c0_i32 = arith.constant 0 : i32
    %c0_i32_0 = arith.constant 0 : i32
    %c0_i32_1 = arith.constant 0 : i32
    return %arg0, %c0_i32, %c0_i32_0 : i32, i32, i32
  }
  func.func @transform_1(%arg0: i32) -> (i32, i32) {
    %c0_i32 = arith.constant 0 : i32
    %c0_i32_0 = arith.constant 0 : i32
    %c0_i32_1 = arith.constant 0 : i32
    return %c0_i32, %c0_i32_0 : i32, i32
  }
  func.func @transform_2(%arg0: i32) -> (i32, i32) {
    %c0_i32 = arith.constant 0 : i32
    %c0_i32_0 = arith.constant 0 : i32
    %c0_i32_1 = arith.constant 0 : i32
    return %c0_i32, %c0_i32_0 : i32, i32
  }
  func.func @transform_3(%arg0: i32) -> (i32, i32, i32) {
    %c0_i32 = arith.constant 0 : i32
    %c0_i32_0 = arith.constant 0 : i32
    %c0_i32_1 = arith.constant 0 : i32
    return %arg0, %c0_i32, %c0_i32_0 : i32, i32, i32
  }
}

</mosaic_0001>

<llo_original>
// kernel: tpu_custom_call.1
$region0: #{tpu_custom_call.1}
  #allocation0 [shape = 'u32[]', space=smem, size = 0x4, offset = 0x4, fixed_abs, tag = 'smem constant byte address 0x4 - core index']
  #allocation1 [shape = 'u32[144,128]{1,0:T(1,128)}', space=vmem, size = 0x12000, scoped, tag = 'internal scratch']
  %s0 = inlined_call_operand.hbm [shape: bf16[2,24,32], index: 0, kind: input, shape index: {}]
  %s1 = inlined_call_operand.hbm [shape: bf16[64,128], index: 1, kind: input, shape index: {}]
  %s2 = inlined_call_operand.vmem [shape: f32[1,128], index: 2, kind: input, shape index: {}]
  %s3 = inlined_call_operand.vmem [shape: f32[2,15,128], index: 3, kind: output, shape index: {}]
  %s4 = sld [smem:[#allocation0]]
  $region30: #{tpu_custom_call.1} parent=0
    _
  %s6 = ssub.s32 1, %s4
  %s7 = scalar_select 0, %s6, %s4
  $region1: #{tpu_custom_call.1} parent=0
    #allocation2 [shape = 'u8[12288]{0}', space=vmem, size = 0x3000, scoped, tag = 'input window, operand 0, single buffered']
    #allocation3 [shape = 's32[1]{0}', space=sflag, size = 0x4, scoped, tag = 'scoped memory for tpu_custom_call.1']
    #allocation4 [shape = 'u8[16384]{0}', space=vmem, size = 0x4000, scoped, tag = 'input window, operand 1, single buffered']
    #allocation5 [shape = 's32[1]{0}', space=sflag, size = 0x4, scoped, tag = 'scoped memory for tpu_custom_call.1']
    %8 = vsyncpa [#allocation3], 0
    %9 = vsyncpa [#allocation5], 0
    // Predicated region
    $region2: #{tpu_custom_call.1} parent=1 // pred_check
      _
    $region3: #{tpu_custom_call.1} parent=1 // pred_check_branch
      %11 = sbr.rel (0) target = $region5
    $region4: #{tpu_custom_call.1} parent=1 // pred_region
      %s13 = ssub.s32 384, 384
      %14 = vsyncadd [#allocation3], %s13
      %s15 = sshll.u32 [#allocation2], 4
      %s16 = int_to_ptr.vmem [resolvable:$true] %s15
      %21 = dma.hbm_to_vmem [thread:$0]  %s0, 384, %s16, [#allocation3], 64, 64, 4
    $region5: #{tpu_custom_call.1} parent=1 // pred_fallthru
      _
    // Predicated region
    $region6: #{tpu_custom_call.1} parent=1 // pred_check
      _
    $region7: #{tpu_custom_call.1} parent=1 // pred_check_branch
      %23 = sbr.rel (0) target = $region9
    $region8: #{tpu_custom_call.1} parent=1 // pred_region
      %s25 = ssub.s32 512, 512
      %26 = vsyncadd [#allocation5], %s25
      %s27 = sshll.u32 [#allocation4], 4
      %s28 = int_to_ptr.vmem [resolvable:$true] %s27
      %33 = dma.hbm_to_vmem [thread:$0]  %s1, 512, %s28, [#allocation5], 64, 64, 4
    $region9: #{tpu_custom_call.1} parent=1 // pred_fallthru
      _
    // Predicated region
    $region10: #{tpu_custom_call.1} parent=1 // pred_check
      _
    $region11: #{tpu_custom_call.1} parent=1 // pred_check_branch
      %35 = sbr.rel (0) target = $region13
    $region12: #{tpu_custom_call.1} parent=1 // pred_region
      _
    $region13: #{tpu_custom_call.1} parent=1 // pred_fallthru
      _
    // Predicated region
    $region14: #{tpu_custom_call.1} parent=1 // pred_check
      _
    $region15: #{tpu_custom_call.1} parent=1 // pred_check_branch
      %37 = sbr.rel (0) target = $region17
    $region16: #{tpu_custom_call.1} parent=1 // pred_region
      %38 = dma.done [#allocation3], 384
    $region17: #{tpu_custom_call.1} parent=1 // pred_fallthru
      _
    // Predicated region
    $region18: #{tpu_custom_call.1} parent=1 // pred_check
      _
    $region19: #{tpu_custom_call.1} parent=1 // pred_check_branch
      %40 = sbr.rel (0) target = $region21
    $region20: #{tpu_custom_call.1} parent=1 // pred_region
      %41 = dma.done [#allocation5], 512
    $region21: #{tpu_custom_call.1} parent=1 // pred_fallthru
      _
    %v43 = vld [vmem:[#allocation2] sm:$0xf]
    %v44 = vld [vmem:[#allocation2 + $0x4] sm:$0xf]
    %v45 = vld [vmem:[#allocation2 + $0x8] sm:$0xf]
    %v46 = vld [vmem:[#allocation2 + $0xc] sm:$0xf]
    %v47 = vld [vmem:[#allocation2 + $0x10] sm:$0xf]
    %v48 = vld [vmem:[#allocation2 + $0x14] sm:$0xf]
    %v49 = vld [vmem:[#allocation4] sm:$0xf]
    %v50 = vld [vmem:[#allocation4 + $0x4] sm:$0xf]
    %v51 = vld [vmem:[#allocation4 + $0x8] sm:$0xf]
    %v52 = vld [vmem:[#allocation4 + $0xc] sm:$0xf]
    %vm53 = vsmask.f32 3328
    %vm54 = vsmask.f32 7440
    %vm55 = vmor %vm53, %vm54
    %v57 = vshrl.u32 %v43, 16
    %v59 = vrot.slane %v57, 4
    %v60 = vshll.u32 %v43, 16
    %v62 = vrot.slane %v60, 5
    %v63 = vor.u32 %v59, %v62
    %v64 = vrot.slane %v63, 4
    %v66 = vshll.u32 %v44, 16
    %v68 = vrot.slane %v66, 5
    %v69 = vsel %vm55, %v64, %v68
    %v70 = vshrl.u32 %v44, 16
    %v72 = vrot.slane %v70, 4
    %v73 = vor.u32 %v72, %v68
    %v74 = vrot.slane %v73, 4
    %v76 = vshll.u32 %v45, 16
    %v78 = vrot.slane %v76, 5
    %v79 = vsel %vm55, %v74, %v78
    %v81 = vshrl.u32 %v46, 16
    %v83 = vrot.slane %v81, 4
    %v84 = vshll.u32 %v46, 16
    %v86 = vrot.slane %v84, 5
    %v87 = vor.u32 %v83, %v86
    %v88 = vrot.slane %v87, 4
    %v90 = vshll.u32 %v47, 16
    %v92 = vrot.slane %v90, 5
    %v93 = vsel %vm55, %v88, %v92
    %v94 = vshrl.u32 %v47, 16
    %v96 = vrot.slane %v94, 4
    %v97 = vor.u32 %v96, %v92
    %v98 = vrot.slane %v97, 4
    %v100 = vshll.u32 %v48, 16
    %v102 = vrot.slane %v100, 5
    %v103 = vsel %vm55, %v98, %v102
    %v104 = vld [vmem:[#allocation4 + $0x10] sm:$0xf]
    %v105 = vld [vmem:[#allocation4 + $0x14] sm:$0xf]
    %v106 = vld [vmem:[#allocation4 + $0x18] sm:$0xf]
    %v107 = vld [vmem:[#allocation4 + $0x1c] sm:$0xf]
    %v108 = vunpack.c.l.b16 %v69
    %v109 = vunpack.c.l.b16 %v79
    %v110 = vunpack.c.l.b16 %v93
    %v111 = vunpack.c.l.b16 %v103
    %v112 = vpack.c.b16 %v109, %v108
    %v113 = vpack.c.b16 %v111, %v110
    %v118 = vunpack.c.l.b16 %v104
    %v119 = vunpack.c.l.b16 %v105
    %v120 = vunpack.c.l.b16 %v106
    %v121 = vunpack.c.l.b16 %v107
    %v122 = vpack.c.b16 %v119, %v118
    %v123 = vpack.c.b16 %v121, %v120
    %vm126 = vcmask 261120
    %v128 = vsel %vm126, %v112, 0
    %v131 = vsel %vm126, %v113, 0
    %133 = vmatprep.subr.bf16.mxu0 0
    %134 = vmatpush1.bf16.msra.mxu0 0
    %135 = vmatprep.subr.bf16.mxu0 0
    %136 = vmatpush1.bf16.msra.mxu0 0
    %137 = vmatprep.subr.bf16.mxu0 0
    %138 = vmatpush1.bf16.msra.mxu0 0
    %139 = vmatprep.subr.bf16.mxu0 0
    %140 = vmatpush1.bf16.msra.mxu0 0
    %141 = vmatprep.subr.bf16.mxu0 0
    %142 = vmatpush1.bf16.msra.mxu0 0
    %143 = vmatprep.subr.bf16.mxu0 0
    %144 = vmatpush1.bf16.msra.mxu0 0
    %145 = vmatprep.subr.bf16.mxu0 0
    %146 = vmatpush1.bf16.msra.mxu0 %v123
    %147 = vmatprep.subr.bf16.mxu0 0
    %148 = vmatpush1.bf16.msra.mxu0 %v122
    %149 = vmatprep.subr.bf16.mxu0 0
    %150 = vmatpush2.bf16.msra.mxu0 0
    %151 = vmatprep.subr.bf16.mxu0 0
    %152 = vmatpush2.bf16.msra.mxu0 0
    %153 = vmatprep.subr.bf16.mxu0 0
    %154 = vmatpush2.bf16.msra.mxu0 0
    %155 = vmatprep.subr.bf16.mxu0 0
    %156 = vmatpush2.bf16.msra.mxu0 0
    %157 = vmatprep.subr.bf16.mxu0 0
    %158 = vmatpush2.bf16.msra.mxu0 0
    %159 = vmatprep.subr.bf16.mxu0 0
    %160 = vmatpush2.bf16.msra.mxu0 0
    %161 = vmatprep.subr.bf16.mxu0 0
    %162 = vmatpush2.bf16.msra.mxu0 0
    %163 = vmatprep.subr.bf16.mxu0 0
    %164 = vmatpush2.bf16.msra.mxu0 0
    %165 = vmatprep.mubr.bf16.mxu0 0
    %166 = vmatmul.mubr.bf16.gmra.mxu0 %v128
    %v167 = vpop.f32.mrf.mxu0
    %v168 = vadd.f32 0.0, %v167
    %v169 = vpop.f32.mrf.mxu0
    %v170 = vpop.f32.mrf.mxu0
    %v171 = vadd.f32 0.0, %v170
    %v172 = vpop.f32.mrf.mxu0
    %173 = vmatprep.mubr.bf16.mxu0 0
    %174 = vmatmul.mubr.bf16.gmra.mxu0 %v131
    %v175 = vpop.f32.mrf.mxu0
    %v176 = vadd.f32 0.0, %v175
    %v177 = vpop.f32.mrf.mxu0
    %v178 = vpop.f32.mrf.mxu0
    %v179 = vadd.f32 0.0, %v178
    %v180 = vpop.f32.mrf.mxu0
    %181 = vdwg.mxu0
    %v186 = vunpack.c.l.b16 %v43
    %v187 = vunpack.c.l.b16 %v44
    %v188 = vunpack.c.l.b16 %v46
    %v189 = vunpack.c.l.b16 %v47
    %v190 = vpack.c.b16 %v187, %v186
    %v191 = vpack.c.b16 %v189, %v188
    %v196 = vunpack.c.l.b16 %v49
    %v197 = vunpack.c.l.b16 %v50
    %v198 = vunpack.c.l.b16 %v51
    %v199 = vunpack.c.l.b16 %v52
    %v200 = vpack.c.b16 %v197, %v196
    %v201 = vpack.c.b16 %v199, %v198
    %v205 = vsel %vm126, %v190, 0
    %v208 = vsel %vm126, %v191, 0
    %210 = vmatprep.subr.bf16.mxu0 0
    %211 = vmatpush1.bf16.msra.mxu0 0
    %212 = vmatprep.subr.bf16.mxu0 0
    %213 = vmatpush1.bf16.msra.mxu0 0
    %214 = vmatprep.subr.bf16.mxu0 0
    %215 = vmatpush1.bf16.msra.mxu0 0
    %216 = vmatprep.subr.bf16.mxu0 0
    %217 = vmatpush1.bf16.msra.mxu0 0
    %218 = vmatprep.subr.bf16.mxu0 0
    %219 = vmatpush1.bf16.msra.mxu0 0
    %220 = vmatprep.subr.bf16.mxu0 0
    %221 = vmatpush1.bf16.msra.mxu0 0
    %222 = vmatprep.subr.bf16.mxu0 0
    %223 = vmatpush1.bf16.msra.mxu0 %v201
    %224 = vmatprep.subr.bf16.mxu0 0
    %225 = vmatpush1.bf16.msra.mxu0 %v200
    %226 = vmatprep.subr.bf16.mxu0 0
    %227 = vmatpush2.bf16.msra.mxu0 0
    %228 = vmatprep.subr.bf16.mxu0 0
    %229 = vmatpush2.bf16.msra.mxu0 0
    %230 = vmatprep.subr.bf16.mxu0 0
    %231 = vmatpush2.bf16.msra.mxu0 0
    %232 = vmatprep.subr.bf16.mxu0 0
    %233 = vmatpush2.bf16.msra.mxu0 0
    %234 = vmatprep.subr.bf16.mxu0 0
    %235 = vmatpush2.bf16.msra.mxu0 0
    %236 = vmatprep.subr.bf16.mxu0 0
    %237 = vmatpush2.bf16.msra.mxu0 0
    %238 = vmatprep.subr.bf16.mxu0 0
    %239 = vmatpush2.bf16.msra.mxu0 0
    %240 = vmatprep.subr.bf16.mxu0 0
    %241 = vmatpush2.bf16.msra.mxu0 0
    %242 = vmatprep.mubr.bf16.mxu0 0
    %243 = vmatmul.mubr.bf16.gmra.mxu0 %v205
    %v244 = vpop.f32.mrf.mxu0
    %v245 = vadd.f32 %v168, %v244
    %v246 = vpop.f32.mrf.mxu0
    %v247 = vpop.f32.mrf.mxu0
    %v248 = vadd.f32 %v171, %v247
    %v249 = vpop.f32.mrf.mxu0
    %250 = vmatprep.mubr.bf16.mxu0 0
    %251 = vmatmul.mubr.bf16.gmra.mxu0 %v208
    %v252 = vpop.f32.mrf.mxu0
    %v253 = vadd.f32 %v176, %v252
    %v254 = vpop.f32.mrf.mxu0
    %v255 = vpop.f32.mrf.mxu0
    %v256 = vadd.f32 %v179, %v255
    %v257 = vpop.f32.mrf.mxu0
    %258 = vdwg.mxu0
    %v259 = vld [vmem:[%s2] sm:$0x1]
    %v261 = vlaneseq
    %v262 = vshrl.u32 %v261, 7
    %v263 = vsub.s32 0, %v262
    %v264 = vrot.slane %v259, %v263
    %v266 = vadd.f32 %v245, %v264
    %v267 = vadd.f32 %v248, %v264
    %v268 = vadd.f32 %v253, %v264
    %v269 = vadd.f32 %v256, %v264
    %270 = vst [vmem:[%s3] sm:$0xff] %v266
    %271 = vst [vmem:[%s3 + $0x8] sm:$0x7f] %v267
    %272 = vst [vmem:[%s3 + $0x10] sm:$0xff] %v268
    %273 = vst [vmem:[%s3 + $0x18] sm:$0x7f] %v269
    // Predicated region
    $region22: #{tpu_custom_call.1} parent=1 // pred_check
      _
    $region23: #{tpu_custom_call.1} parent=1 // pred_check_branch
      %275 = sbr.rel (0) target = $region25
    $region24: #{tpu_custom_call.1} parent=1 // pred_region
      _
    $region25: #{tpu_custom_call.1} parent=1 // pred_fallthru
      _
    // Predicated region
    $region26: #{tpu_custom_call.1} parent=1 // pred_check
      _
    $region27: #{tpu_custom_call.1} parent=1 // pred_check_branch
      %277 = sbr.rel (0) target = $region29
    $region28: #{tpu_custom_call.1} parent=1 // pred_region
      _
    $region29: #{tpu_custom_call.1} parent=1 // pred_fallthru
      _
    %278 = vsyncpa [#allocation3], 1
    %279 = vsyncpa [#allocation5], 1

</llo_original>
